<compile_context>
chip_gen: v7x
topology: tpu7x:2x2x1
jax: 0.10.0
libtpu: 0.0.40
codegen_flags: <defaults>
</compile_context>

<pallas_src>
import jax
import jax.numpy as jnp
import numpy as np
from jax.experimental import pallas as pl
from jax.experimental.pallas import tpu as pltpu


def _round_up(x: int, m: int) -> int:
    return ((x + m - 1) // m) * m


def _make_embed_kernel(tok_block: int, n_inflight: int):
    """Kernel: gather `tok_block` rows of W_E (HBM) into a VMEM slab, store once."""

    def _embed_kernel(tok_ref, w_hbm, out_ref, scratch, sems):
        base = pl.program_id(0) * tok_block

        def issue(r):
            tok = tok_ref[base + r]                      # SMEM scalar read
            pltpu.make_async_copy(
                w_hbm.at[tok], scratch.at[r], sems.at[r % n_inflight]
            ).start()

        def retire(r):
            # Descriptor only used to match the byte count on the semaphore slot.
            pltpu.make_async_copy(
                w_hbm.at[0], scratch.at[r], sems.at[r % n_inflight]
            ).wait()

        # Prime n_inflight row gathers.
        @pl.loop(0, n_inflight)
        def _(r):
            issue(r)

        # Steady state: retire row r, immediately launch row r + n_inflight,
        # keeping n_inflight DMAs in flight at all times.
        @pl.loop(0, tok_block - n_inflight)
        def _(r):
            retire(r)
            issue(r + n_inflight)

        # Drain the tail.
        @pl.loop(tok_block - n_inflight, tok_block)
        def _(r):
            retire(r)

        # One dense, unmasked full-tile store (lane/sublane-dense output slab).
        out_ref[...] = scratch[...]

    return _embed_kernel


def embed(tokens: jax.Array, W_E: jax.Array, *, tok_block: int = 512,
          n_inflight: int = 8) -> jax.Array:
    """Pallas embedding lookup: returns W_E[tokens].

    tokens: (batch, position) integer ids
    W_E:    (d_vocab, d_model)
    out:    (batch, position, d_model), same dtype as W_E
    """
    batch, position = tokens.shape
    d_vocab, d_model = W_E.shape
    n = batch * position

    # Token block: multiple of 8 (sublane-dense f32 tile), never larger than needed.
    tok_block = max(8, min(tok_block, _round_up(n, 8)))
    tok_block = _round_up(tok_block, 8)
    n_inflight = max(1, min(n_inflight, tok_block))

    n_pad = _round_up(n, tok_block)
    n_blocks = n_pad // tok_block

    # Clamp ids (documented precondition of the gather); pad with token 0.
    tok_flat = jnp.clip(tokens.reshape(n).astype(jnp.int32), 0, d_vocab - 1)
    if n_pad != n:
        tok_flat = jnp.concatenate(
            [tok_flat, jnp.zeros((n_pad - n,), jnp.int32)], axis=0)

    itemsize = jnp.dtype(W_E.dtype).itemsize
    cost = pl.CostEstimate(
        flops=0,
        transcendentals=0,
        bytes_accessed=2 * n_pad * d_model * itemsize + n_pad * 4,
    )

    grid_spec = pltpu.PrefetchScalarGridSpec(
        num_scalar_prefetch=1,                      # tok_flat -> SMEM
        grid=(n_blocks,),
        in_specs=[pl.BlockSpec(memory_space=pl.ANY)],   # W_E stays in HBM; manual DMA gather
        out_specs=pl.BlockSpec((tok_block, d_model), lambda i, tok: (i, 0)),
        scratch_shapes=[
            pltpu.VMEM((tok_block, d_model), W_E.dtype),
            pltpu.SemaphoreType.DMA((n_inflight,)),
        ],
    )

    out_flat = pl.pallas_call(
        _make_embed_kernel(tok_block, n_inflight),
        grid_spec=grid_spec,
        out_shape=jax.ShapeDtypeStruct((n_pad, d_model), W_E.dtype),
        compiler_params=pltpu.CompilerParams(
            dimension_semantics=("parallel",),      # safe: disjoint output blocks, read-only table
        ),
        cost_estimate=cost,
    )(tok_flat, W_E)

    return out_flat[:n].reshape(batch, position, d_model)


if __name__ == "__main__":
    # Small, deterministic config consistent with the module's __init__.
    d_vocab = 64
    d_model = 128
    batch = 2
    position = 8
    init_range = 0.02

    key = jax.random.PRNGKey(0)
    k_w, k_tok = jax.random.split(key)

    # nn.init.normal_(W_E, std=init_range)
    W_E = (init_range * jax.random.normal(k_w, (d_vocab, d_model))).astype(jnp.float32)
    tokens = jax.random.randint(k_tok, (batch, position), 0, d_vocab, dtype=jnp.int32)

    out = jax.block_until_ready(embed(tokens, W_E))
    ref = jnp.take(W_E, tokens, axis=0)
    assert out.shape == (batch, position, d_model)
    np.testing.assert_allclose(np.asarray(out), np.asarray(ref), rtol=0, atol=0)

    # Second check: multiple grid steps + ragged tail (exercises padding path).
    d_model2, batch2, position2 = 256, 3, 37
    k_w2, k_tok2 = jax.random.split(jax.random.PRNGKey(0))
    W_E2 = (init_range * jax.random.normal(k_w2, (d_vocab, d_model2))).astype(jnp.float32)
    tokens2 = jax.random.randint(k_tok2, (batch2, position2), 0, d_vocab, dtype=jnp.int32)
    out2 = jax.block_until_ready(embed(tokens2, W_E2, tok_block=32, n_inflight=8))
    ref2 = jnp.take(W_E2, tokens2, axis=0)
    np.testing.assert_allclose(np.asarray(out2), np.asarray(ref2), rtol=0, atol=0)

    print("KERNEL_OK")
</pallas_src>

<mosaic_0001>
module attributes {stable_mosaic.version = 11 : i64} {
  func.func @_embed_kernel(%arg0: i32, %arg1: memref<16xi32, #tpu.memory_space<smem>>, %arg2: memref<64x128xf32, #tpu.memory_space<any>>, %arg3: memref<16x128xf32, #tpu.memory_space<vmem>>, %arg4: memref<16x128xf32, #tpu.memory_space<vmem>>, %arg5: memref<8x!tpu.dma_semaphore, #tpu.memory_space<semaphore_mem>>) attributes {dimension_semantics = [#tpu.dimension_semantics<parallel>], iteration_bounds = array<i64: 1>, scalar_prefetch = 1 : i64, scratch_operands = 2 : i64, tpu.core_type = #tpu.core_type<tc>, window_params = [{}, {transform_indices = @transform_1, window_bounds = array<i64: 16, 128>}]} {
    %c16_i32 = arith.constant 16 : i32
    %0 = arith.muli %arg0, %c16_i32 : i32
    %c0_i32 = arith.constant 0 : i32
    %c8_i32 = arith.constant 8 : i32
    %1 = arith.addi %c0_i32, %c8_i32 : i32
    %c1_i32 = arith.constant 1 : i32
    scf.for %arg6 = %c0_i32 to %1 step %c1_i32  : i32 {
      %c1_i32_12 = arith.constant 1 : i32
      %6 = arith.muli %arg6, %c1_i32_12 : i32
      %c0_i32_13 = arith.constant 0 : i32
      %7 = arith.addi %c0_i32_13, %6 : i32
      %8 = arith.addi %0, %7 : i32
      %9 = arith.index_cast %8 : i32 to index
      %10 = memref.load %arg1[%9] : memref<16xi32, #tpu.memory_space<smem>>
      %c8_i32_14 = arith.constant 8 : i32
      %c0_i32_15 = arith.constant 0 : i32
      %11 = arith.cmpi eq, %c8_i32_14, %c0_i32_15 : i32
      %c1_i32_16 = arith.constant 1 : i32
      %12 = arith.select %11, %c1_i32_16, %c8_i32_14 : i32
      %13 = arith.remsi %7, %12 : i32
      %c0_i32_17 = arith.constant 0 : i32
      %14 = arith.cmpi ne, %13, %c0_i32_17 : i32
      %c0_i32_18 = arith.constant 0 : i32
      %15 = arith.cmpi slt, %13, %c0_i32_18 : i32
      %c0_i32_19 = arith.constant 0 : i32
      %16 = arith.cmpi slt, %12, %c0_i32_19 : i32
      %17 = arith.xori %15, %16 : i1
      %18 = arith.andi %17, %14 : i1
      %19 = arith.addi %13, %12 : i32
      %20 = arith.select %18, %19, %13 : i32
      %c0_i32_20 = arith.constant 0 : i32
      %21 = tpu.memref_slice %arg2[%10, %c0_i32_20] : memref<64x128xf32, #tpu.memory_space<any>> -> memref<1x128xf32, #tpu.memory_space<any>>
      %22 = tpu.memref_squeeze %21 : memref<1x128xf32, #tpu.memory_space<any>> -> memref<128xf32, #tpu.memory_space<any>>
      %c0_i32_21 = arith.constant 0 : i32
      %23 = tpu.memref_slice %arg4[%7, %c0_i32_21] : memref<16x128xf32, #tpu.memory_space<vmem>> -> memref<1x128xf32, #tpu.memory_space<vmem>>
      %24 = tpu.memref_squeeze %23 : memref<1x128xf32, #tpu.memory_space<vmem>> -> memref<128xf32, #tpu.memory_space<vmem>>
      %25 = tpu.memref_slice %arg5[%20] : memref<8x!tpu.dma_semaphore, #tpu.memory_space<semaphore_mem>> -> memref<1x!tpu.dma_semaphore, #tpu.memory_space<semaphore_mem>>
      %26 = tpu.memref_squeeze %25 : memref<1x!tpu.dma_semaphore, #tpu.memory_space<semaphore_mem>> -> memref<!tpu.dma_semaphore, #tpu.memory_space<semaphore_mem>>
      tpu.enqueue_dma source(%22 : memref<128xf32, #tpu.memory_space<any>>) target(%24 : memref<128xf32, #tpu.memory_space<vmem>>) target_semaphore(%26 : memref<!tpu.dma_semaphore, #tpu.memory_space<semaphore_mem>>)
    }
    %c8_i32_0 = arith.constant 8 : i32
    %c0_i32_1 = arith.constant 0 : i32
    %c8_i32_2 = arith.constant 8 : i32
    %2 = arith.addi %c0_i32_1, %c8_i32_2 : i32
    %c1_i32_3 = arith.constant 1 : i32
    scf.for %arg6 = %c0_i32_1 to %2 step %c1_i32_3  : i32 {
      %c1_i32_12 = arith.constant 1 : i32
      %6 = arith.muli %arg6, %c1_i32_12 : i32
      %c0_i32_13 = arith.constant 0 : i32
      %7 = arith.addi %c0_i32_13, %6 : i32
      %c8_i32_14 = arith.constant 8 : i32
      %c0_i32_15 = arith.constant 0 : i32
      %8 = arith.cmpi eq, %c8_i32_14, %c0_i32_15 : i32
      %c1_i32_16 = arith.constant 1 : i32
      %9 = arith.select %8, %c1_i32_16, %c8_i32_14 : i32
      %10 = arith.remsi %7, %9 : i32
      %c0_i32_17 = arith.constant 0 : i32
      %11 = arith.cmpi ne, %10, %c0_i32_17 : i32
      %c0_i32_18 = arith.constant 0 : i32
      %12 = arith.cmpi slt, %10, %c0_i32_18 : i32
      %c0_i32_19 = arith.constant 0 : i32
      %13 = arith.cmpi slt, %9, %c0_i32_19 : i32
      %14 = arith.xori %12, %13 : i1
      %15 = arith.andi %14, %11 : i1
      %16 = arith.addi %10, %9 : i32
      %17 = arith.select %15, %16, %10 : i32
      %c0_i32_20 = arith.constant 0 : i32
      %c0_i32_21 = arith.constant 0 : i32
      %18 = tpu.memref_slice %arg2[%c0_i32_20, %c0_i32_21] : memref<64x128xf32, #tpu.memory_space<any>> -> memref<1x128xf32, #tpu.memory_space<any>>
      %19 = tpu.memref_squeeze %18 : memref<1x128xf32, #tpu.memory_space<any>> -> memref<128xf32, #tpu.memory_space<any>>
      %c0_i32_22 = arith.constant 0 : i32
      %20 = tpu.memref_slice %arg4[%7, %c0_i32_22] : memref<16x128xf32, #tpu.memory_space<vmem>> -> memref<1x128xf32, #tpu.memory_space<vmem>>
      %21 = tpu.memref_squeeze %20 : memref<1x128xf32, #tpu.memory_space<vmem>> -> memref<128xf32, #tpu.memory_space<vmem>>
      %22 = tpu.memref_slice %arg5[%17] : memref<8x!tpu.dma_semaphore, #tpu.memory_space<semaphore_mem>> -> memref<1x!tpu.dma_semaphore, #tpu.memory_space<semaphore_mem>>
      %23 = tpu.memref_squeeze %22 : memref<1x!tpu.dma_semaphore, #tpu.memory_space<semaphore_mem>> -> memref<!tpu.dma_semaphore, #tpu.memory_space<semaphore_mem>>
      tpu.wait_dma2 semaphore(%23 : memref<!tpu.dma_semaphore, #tpu.memory_space<semaphore_mem>>) src(%19 : memref<128xf32, #tpu.memory_space<any>>) dst(%21 : memref<128xf32, #tpu.memory_space<vmem>>)
      %c8_i32_23 = arith.constant 8 : i32
      %24 = arith.addi %7, %c8_i32_23 : i32
      %25 = arith.addi %0, %24 : i32
      %26 = arith.index_cast %25 : i32 to index
      %27 = memref.load %arg1[%26] : memref<16xi32, #tpu.memory_space<smem>>
      %c8_i32_24 = arith.constant 8 : i32
      %c0_i32_25 = arith.constant 0 : i32
      %28 = arith.cmpi eq, %c8_i32_24, %c0_i32_25 : i32
      %c1_i32_26 = arith.constant 1 : i32
      %29 = arith.select %28, %c1_i32_26, %c8_i32_24 : i32
      %30 = arith.remsi %24, %29 : i32
      %c0_i32_27 = arith.constant 0 : i32
      %31 = arith.cmpi ne, %30, %c0_i32_27 : i32
      %c0_i32_28 = arith.constant 0 : i32
      %32 = arith.cmpi slt, %30, %c0_i32_28 : i32
      %c0_i32_29 = arith.constant 0 : i32
      %33 = arith.cmpi slt, %29, %c0_i32_29 : i32
      %34 = arith.xori %32, %33 : i1
      %35 = arith.andi %34, %31 : i1
      %36 = arith.addi %30, %29 : i32
      %37 = arith.select %35, %36, %30 : i32
      %c0_i32_30 = arith.constant 0 : i32
      %38 = tpu.memref_slice %arg2[%27, %c0_i32_30] : memref<64x128xf32, #tpu.memory_space<any>> -> memref<1x128xf32, #tpu.memory_space<any>>
      %39 = tpu.memref_squeeze %38 : memref<1x128xf32, #tpu.memory_space<any>> -> memref<128xf32, #tpu.memory_space<any>>
      %c0_i32_31 = arith.constant 0 : i32
      %40 = tpu.memref_slice %arg4[%24, %c0_i32_31] : memref<16x128xf32, #tpu.memory_space<vmem>> -> memref<1x128xf32, #tpu.memory_space<vmem>>
      %41 = tpu.memref_squeeze %40 : memref<1x128xf32, #tpu.memory_space<vmem>> -> memref<128xf32, #tpu.memory_space<vmem>>
      %42 = tpu.memref_slice %arg5[%37] : memref<8x!tpu.dma_semaphore, #tpu.memory_space<semaphore_mem>> -> memref<1x!tpu.dma_semaphore, #tpu.memory_space<semaphore_mem>>
      %43 = tpu.memref_squeeze %42 : memref<1x!tpu.dma_semaphore, #tpu.memory_space<semaphore_mem>> -> memref<!tpu.dma_semaphore, #tpu.memory_space<semaphore_mem>>
      tpu.enqueue_dma source(%39 : memref<128xf32, #tpu.memory_space<any>>) target(%41 : memref<128xf32, #tpu.memory_space<vmem>>) target_semaphore(%43 : memref<!tpu.dma_semaphore, #tpu.memory_space<semaphore_mem>>)
    }
    %c8_i32_4 = arith.constant 8 : i32
    %c0_i32_5 = arith.constant 0 : i32
    %c8_i32_6 = arith.constant 8 : i32
    %3 = arith.addi %c0_i32_5, %c8_i32_6 : i32
    %c1_i32_7 = arith.constant 1 : i32
    scf.for %arg6 = %c0_i32_5 to %3 step %c1_i32_7  : i32 {
      %c1_i32_12 = arith.constant 1 : i32
      %6 = arith.muli %arg6, %c1_i32_12 : i32
      %c8_i32_13 = arith.constant 8 : i32
      %7 = arith.addi %c8_i32_13, %6 : i32
      %c8_i32_14 = arith.constant 8 : i32
      %c0_i32_15 = arith.constant 0 : i32
      %8 = arith.cmpi eq, %c8_i32_14, %c0_i32_15 : i32
      %c1_i32_16 = arith.constant 1 : i32
      %9 = arith.select %8, %c1_i32_16, %c8_i32_14 : i32
      %10 = arith.remsi %7, %9 : i32
      %c0_i32_17 = arith.constant 0 : i32
      %11 = arith.cmpi ne, %10, %c0_i32_17 : i32
      %c0_i32_18 = arith.constant 0 : i32
      %12 = arith.cmpi slt, %10, %c0_i32_18 : i32
      %c0_i32_19 = arith.constant 0 : i32
      %13 = arith.cmpi slt, %9, %c0_i32_19 : i32
      %14 = arith.xori %12, %13 : i1
      %15 = arith.andi %14, %11 : i1
      %16 = arith.addi %10, %9 : i32
      %17 = arith.select %15, %16, %10 : i32
      %c0_i32_20 = arith.constant 0 : i32
      %c0_i32_21 = arith.constant 0 : i32
      %18 = tpu.memref_slice %arg2[%c0_i32_20, %c0_i32_21] : memref<64x128xf32, #tpu.memory_space<any>> -> memref<1x128xf32, #tpu.memory_space<any>>
      %19 = tpu.memref_squeeze %18 : memref<1x128xf32, #tpu.memory_space<any>> -> memref<128xf32, #tpu.memory_space<any>>
      %c0_i32_22 = arith.constant 0 : i32
      %20 = tpu.memref_slice %arg4[%7, %c0_i32_22] : memref<16x128xf32, #tpu.memory_space<vmem>> -> memref<1x128xf32, #tpu.memory_space<vmem>>
      %21 = tpu.memref_squeeze %20 : memref<1x128xf32, #tpu.memory_space<vmem>> -> memref<128xf32, #tpu.memory_space<vmem>>
      %22 = tpu.memref_slice %arg5[%17] : memref<8x!tpu.dma_semaphore, #tpu.memory_space<semaphore_mem>> -> memref<1x!tpu.dma_semaphore, #tpu.memory_space<semaphore_mem>>
      %23 = tpu.memref_squeeze %22 : memref<1x!tpu.dma_semaphore, #tpu.memory_space<semaphore_mem>> -> memref<!tpu.dma_semaphore, #tpu.memory_space<semaphore_mem>>
      tpu.wait_dma2 semaphore(%23 : memref<!tpu.dma_semaphore, #tpu.memory_space<semaphore_mem>>) src(%19 : memref<128xf32, #tpu.memory_space<any>>) dst(%21 : memref<128xf32, #tpu.memory_space<vmem>>)
    }
    %c8_i32_8 = arith.constant 8 : i32
    %c0 = arith.constant 0 : index
    %c0_9 = arith.constant 0 : index
    %4 = vector.load %arg4[%c0, %c0_9] : memref<16x128xf32, #tpu.memory_space<vmem>>, vector<16x128xf32>
    %c0_10 = arith.constant 0 : index
    %c0_11 = arith.constant 0 : index
    %5 = vector.load %arg3[%c0_10, %c0_11] : memref<16x128xf32, #tpu.memory_space<vmem>>, vector<16x128xf32>
    tpu.vector_store %arg3[%c0_10, %c0_11], %4 {strides = array<i32>} : memref<16x128xf32, #tpu.memory_space<vmem>>, vector<16x128xf32>,
    return
  }
  func.func @transform_1(%arg0: i32, %arg1: memref<16xi32, #tpu.memory_space<smem>>) -> (i32, i32) {
    %c0_i32 = arith.constant 0 : i32
    %c0_i32_0 = arith.constant 0 : i32
    return %arg0, %c0_i32 : i32, i32
  }
}

</mosaic_0001>

<llo_original>
// kernel: tpu_custom_call.1
$region0: #{tpu_custom_call.1}
  #allocation0 [shape = 'u32[]', space=smem, size = 0x4, offset = 0x4, fixed_abs, tag = 'smem constant byte address 0x4 - core index']
  #allocation1 [shape = 'u32[144,128]{1,0:T(1,128)}', space=vmem, size = 0x12000, scoped, tag = 'internal scratch']
  #allocation2 [shape = 'f32[16,128]{1,0:T(8,128)}', space=vmem, size = 0x2000, scoped, tag = 'scratch operand']
  #allocation3 [shape = 's32[8]{0}', space=sflag, size = 0x20, scoped, tag = 'scratch operand']
  #allocation4 [shape = 's32[1]{0}', space=sflag, size = 0x4, scoped, tag = 'scoped memory for tpu_custom_call.1']
  #allocation5 [shape = 'u8[512]{0}', space=smem, size = 0x200, scoped, tag = 'prefetched SMEM operand 0']
  #allocation8 [shape = 's32[]', space=sflag, size = 0x4, offset = 0, fixed_abs, tag = 'sflag constant byte address 0x0 - dummy sync flag']
  #allocation9 [shape = 's32[]', space=sflag, size = 0x4, offset = 0, fixed_abs, tag = 'sflag constant byte address 0x0 - dummy sync flag']
  #allocation10 [shape = 'u32[]', space=smem, size = 0x4, offset = 0x44, fixed_abs, tag = 'smem constant byte address 0x44 - assertion arg 0']
  #allocation11 [shape = 'u32[]', space=smem, size = 0x4, offset = 0x48, fixed_abs, tag = 'smem constant byte address 0x48 - assertion arg 1']
  #allocation12 [shape = 's32[]', space=sflag, size = 0x4, offset = 0, fixed_abs, tag = 'sflag constant byte address 0x0 - dummy sync flag']
  #allocation13 [shape = 's32[]', space=sflag, size = 0x4, offset = 0, fixed_abs, tag = 'sflag constant byte address 0x0 - dummy sync flag']
  %s0 = inlined_call_operand.hbm [shape: s32[16], index: 0, kind: input, shape index: {}]
  %s1 = inlined_call_operand.hbm [shape: f32[64,128], index: 1, kind: input, shape index: {}]
  %s2 = inlined_call_operand.hbm [shape: f32[16,128], index: 2, kind: output, shape index: {}]
  %s3 = sld [smem:[#allocation0]]
  $region39: #{tpu_custom_call.1} parent=0
    _
  %s5 = ssub.s32 1, %s3
  %s6 = scalar_select 0, %s5, %s3
  %8 = dma.hbm_to_smem %s0, 16, [#allocation5], [#allocation4]
  %9 = dma.done [#allocation4], 16
  %10 = sfence
  $region1: #{tpu_custom_call.1} parent=0
    #allocation6 [shape = 'u8[8192]{0}', space=vmem, size = 0x2000, scoped, tag = 'output window, operand 0, single buffered']
    #allocation7 [shape = 's32[1]{0}', space=sflag, size = 0x4, scoped, tag = 'scoped memory for tpu_custom_call.1']
    %11 = vsyncpa [#allocation7], 0
    %s12 = smul.u32 0, 16
    loop: start=0, step=1, limit=8
    $region2: #{tpu_custom_call.1} parent=1 // loop_pre_header
      _
    $region3: #{tpu_custom_call.1} parent=1 // loop_header
      %s14 = sphi 0, %s18
      %p15 = scmp.ge.s32.totalorder %s14, 8
    $region4: #{tpu_custom_call.1} parent=1 // loop_header_branch
      %17 = sbr.rel (%p15) target = $region8
    $region5: #{tpu_custom_call.1} parent=1 // loop_body
      %s19 = sadd.s32 %s12, %s14
      %s20 = sld [smem:[#allocation5 + %s19]]
      %p21 = scmp.lt.s32.totalorder %s14, 0
      %s22 = ssub.s32 0, %s14
      %s23 = scalar_select %p21, %s22, %s14
      %s24 = sand.u32 %s23, 7
      %s25 = ssub.s32 0, %s24
      %s26 = scalar_select %p21, %s25, %s24
      %p27 = scmp.ne.s32.totalorder %s26, 0
      %p28 = scmp.lt.s32.totalorder %s26, 0
      %p29 = pnand %p28, %p27
      %p30 = pneg %p29
      %s31 = sadd.s32 %s26, 8
      %s32 = scalar_select %p30, %s31, %s26
      %s33 = smul.addr %s20, 16
      %s34 = scalar_lea.hbm %s1, %s33
      %s35 = scalar_lea.vmem [#allocation2], %s14
      %s36 = scalar_lea.sflag [#allocation3], %s32
      // Predicated region
      $region9: #{tpu_custom_call.1} parent=5 // pred_check
        _
      $region10: #{tpu_custom_call.1} parent=5 // pred_check_branch
        %38 = sbr.rel target = $region12
      $region11: #{tpu_custom_call.1} parent=5 // pred_region
        %39 = sst [smem:[#allocation10]] [#allocation9]
        %40 = sst [smem:[#allocation11]] [#allocation8]
      $region12: #{tpu_custom_call.1} parent=5 // pred_fallthru
        _
      %42 = shalt.err (0)
      %s44 = sshll.u32 %s35, 4
      %s45 = int_to_ptr.vmem [resolvable:$true] %s44
      %47 = dma.hbm_to_vmem [thread:$0]  %s34, 16, %s45, %s36
    $region6: #{tpu_custom_call.1} parent=1 // loop_footer
      %s18 = sadd.s32 1, %s14
    $region7: #{tpu_custom_call.1} parent=1 // loop_footer_branch
      %13 = sbr.rel target = $region3
    $region8: #{tpu_custom_call.1} parent=1 // loop_exit
      _
    loop: start=0, step=1, limit=8
    $region13: #{tpu_custom_call.1} parent=1 // loop_pre_header
      _
    $region14: #{tpu_custom_call.1} parent=1 // loop_header
      %s49 = sphi 0, %s53
      %p50 = scmp.ge.s32.totalorder %s49, 8
    $region15: #{tpu_custom_call.1} parent=1 // loop_header_branch
      %52 = sbr.rel (%p50) target = $region19
    $region16: #{tpu_custom_call.1} parent=1 // loop_body
      %p54 = scmp.lt.s32.totalorder %s49, 0
      %s55 = ssub.s32 0, %s49
      %s56 = scalar_select %p54, %s55, %s49
      %s57 = sand.u32 %s56, 7
      %s58 = ssub.s32 0, %s57
      %s59 = scalar_select %p54, %s58, %s57
      %p60 = scmp.ne.s32.totalorder %s59, 0
      %p61 = scmp.lt.s32.totalorder %s59, 0
      %p62 = pnand %p61, %p60
      %p63 = pneg %p62
      %s64 = sadd.s32 %s59, 8
      %s65 = scalar_select %p63, %s64, %s59
      %s66 = scalar_lea.sflag [#allocation3], %s65
      %68 = dma.done %s66, 16
      %s69 = sadd.s32 %s49, 8
      %s70 = sadd.s32 %s12, %s69
      %s71 = sld [smem:[#allocation5 + %s70]]
      %p72 = scmp.lt.s32.totalorder %s69, 0
      %s73 = ssub.s32 0, %s69
      %s74 = scalar_select %p72, %s73, %s69
      %s75 = sand.u32 %s74, 7
      %s76 = ssub.s32 0, %s75
      %s77 = scalar_select %p72, %s76, %s75
      %p78 = scmp.ne.s32.totalorder %s77, 0
      %p79 = scmp.lt.s32.totalorder %s77, 0
      %p80 = pnand %p79, %p78
      %p81 = pneg %p80
      %s82 = sadd.s32 %s77, 8
      %s83 = scalar_select %p81, %s82, %s77
      %s84 = smul.addr %s71, 16
      %s85 = scalar_lea.hbm %s1, %s84
      %s86 = scalar_lea.vmem [#allocation2], %s69
      %s87 = scalar_lea.sflag [#allocation3], %s83
      // Predicated region
      $region20: #{tpu_custom_call.1} parent=16 // pred_check
        _
      $region21: #{tpu_custom_call.1} parent=16 // pred_check_branch
        %89 = sbr.rel target = $region23
      $region22: #{tpu_custom_call.1} parent=16 // pred_region
        %90 = sst [smem:[#allocation10]] [#allocation13]
        %91 = sst [smem:[#allocation11]] [#allocation12]
      $region23: #{tpu_custom_call.1} parent=16 // pred_fallthru
        _
      %93 = shalt.err (0)
      %s95 = sshll.u32 %s86, 4
      %s96 = int_to_ptr.vmem [resolvable:$true] %s95
      %98 = dma.hbm_to_vmem [thread:$0]  %s85, 16, %s96, %s87
    $region17: #{tpu_custom_call.1} parent=1 // loop_footer
      %s53 = sadd.s32 1, %s49
    $region18: #{tpu_custom_call.1} parent=1 // loop_footer_branch
      %48 = sbr.rel target = $region14
    $region19: #{tpu_custom_call.1} parent=1 // loop_exit
      _
    loop: start=0, step=1, limit=8
    $region24: #{tpu_custom_call.1} parent=1 // loop_pre_header
      _
    $region25: #{tpu_custom_call.1} parent=1 // loop_header
      %s100 = sphi 0, %s104
      %p101 = scmp.ge.s32.totalorder %s100, 8
    $region26: #{tpu_custom_call.1} parent=1 // loop_header_branch
      %103 = sbr.rel (%p101) target = $region30
    $region27: #{tpu_custom_call.1} parent=1 // loop_body
      %s105 = sadd.s32 %s100, 8
      %p106 = scmp.lt.s32.totalorder %s105, 0
      %s107 = ssub.s32 0, %s105
      %s108 = scalar_select %p106, %s107, %s105
      %s109 = sand.u32 %s108, 7
      %s110 = ssub.s32 0, %s109
      %s111 = scalar_select %p106, %s110, %s109
      %p112 = scmp.ne.s32.totalorder %s111, 0
      %p113 = scmp.lt.s32.totalorder %s111, 0
      %p114 = pnand %p113, %p112
      %p115 = pneg %p114
      %s116 = sadd.s32 %s111, 8
      %s117 = scalar_select %p115, %s116, %s111
      %s118 = scalar_lea.sflag [#allocation3], %s117
      %120 = dma.done %s118, 16
    $region28: #{tpu_custom_call.1} parent=1 // loop_footer
      %s104 = sadd.s32 1, %s100
    $region29: #{tpu_custom_call.1} parent=1 // loop_footer_branch
      %99 = sbr.rel target = $region25
    $region30: #{tpu_custom_call.1} parent=1 // loop_exit
      _
    %v121 = vld [vmem:[#allocation2] sm:$0xff]
    %v122 = vld [vmem:[#allocation2 + $0x8] sm:$0xff]
    %123 = vst [vmem:[#allocation6] sm:$0xff] %v121
    %124 = vst [vmem:[#allocation6 + $0x8] sm:$0xff] %v122
    // Predicated region
    $region31: #{tpu_custom_call.1} parent=1 // pred_check
      _
    $region32: #{tpu_custom_call.1} parent=1 // pred_check_branch
      %126 = sbr.rel (0) target = $region34
    $region33: #{tpu_custom_call.1} parent=1 // pred_region
      %s128 = ssub.s32 256, 256
      %129 = vsyncadd [#allocation7], %s128
      %s130 = sshll.u32 [#allocation6], 4
      %s131 = int_to_ptr.vmem [resolvable:$true] %s130
      %136 = dma.vmem_to_hbm [thread:$0]  %s131, 256, %s2, [#allocation7], 128, 128, 8
    $region34: #{tpu_custom_call.1} parent=1 // pred_fallthru
      _
    // Predicated region
    $region35: #{tpu_custom_call.1} parent=1 // pred_check
      _
    $region36: #{tpu_custom_call.1} parent=1 // pred_check_branch
      %138 = sbr.rel (0) target = $region38
    $region37: #{tpu_custom_call.1} parent=1 // pred_region
      %139 = dma.done [#allocation7], 256
    $region38: #{tpu_custom_call.1} parent=1 // pred_fallthru
      _
    %140 = vsyncpa [#allocation7], 1
  %141 = vsyncmov [#allocation3]
  %s142 = vpop.sfrf %141
  %p143 = scmp.eq.s32.totalorder %s142, 0
  %p144 = pneg %p143
  %146 = shalt.err (%p144)
  %s147 = scalar_lea.sflag [#allocation3], 1
  %148 = vsyncmov %s147
  %s149 = vpop.sfrf %148
  %p150 = scmp.eq.s32.totalorder %s149, 0
  %p151 = pneg %p150
  %153 = shalt.err (%p151)
  %s154 = scalar_lea.sflag [#allocation3], 2
  %155 = vsyncmov %s154
  %s156 = vpop.sfrf %155
  %p157 = scmp.eq.s32.totalorder %s156, 0
  %p158 = pneg %p157
  %160 = shalt.err (%p158)
  %s161 = scalar_lea.sflag [#allocation3], 3
  %162 = vsyncmov %s161
  %s163 = vpop.sfrf %162
  %p164 = scmp.eq.s32.totalorder %s163, 0
  %p165 = pneg %p164
  %167 = shalt.err (%p165)
  %s168 = scalar_lea.sflag [#allocation3], 4
  %169 = vsyncmov %s168
  %s170 = vpop.sfrf %169
  %p171 = scmp.eq.s32.totalorder %s170, 0
  %p172 = pneg %p171
  %174 = shalt.err (%p172)
  %s175 = scalar_lea.sflag [#allocation3], 5
  %176 = vsyncmov %s175
  %s177 = vpop.sfrf %176
  %p178 = scmp.eq.s32.totalorder %s177, 0
  %p179 = pneg %p178
  %181 = shalt.err (%p179)
  %s182 = scalar_lea.sflag [#allocation3], 6
  %183 = vsyncmov %s182
  %s184 = vpop.sfrf %183
  %p185 = scmp.eq.s32.totalorder %s184, 0
  %p186 = pneg %p185
  %188 = shalt.err (%p186)
  %s189 = scalar_lea.sflag [#allocation3], 7
  %190 = vsyncmov %s189
  %s191 = vpop.sfrf %190
  %p192 = scmp.eq.s32.totalorder %s191, 0
  %p193 = pneg %p192
  %195 = shalt.err (%p193)

</llo_original>
